<compile_context>
chip_gen: v5e
topology: v5e:2x2
jax: 0.10.0
libtpu: 0.0.40
codegen_flags: <defaults>
</compile_context>

<pallas_src>
import functools

import jax
import jax.numpy as jnp
from jax import lax
from jax.experimental import pallas as pl
from jax.experimental.pallas import tpu as pltpu


def _backbone_kernel(x0_ref, x1_ref, x2_ref, x3_ref,
                     w1a_ref, b1a_ref, w2a_ref, b2a_ref,
                     w1b_ref, b1b_ref, w2b_ref, b2b_ref,
                     o_ref, *, lq):
    """Fused forward of both res blocks for one batch tile.

    x{0..3}_ref: (m, C_in)  phase-k rows, x_k[b*lq + t] = x[b, 4t + k]
    w*_ref:      im2col conv weights (3*C_prev, C_next), BN scale folded in
    b*_ref:      (1, C_next) folded conv-bias + BN shift
    o_ref:       (m, C2)    final block output rows (m = b_tile * lq = b_tile*L/4)
    """
    f32 = jnp.float32
    m = x0_ref.shape[0]
    c1 = w1a_ref.shape[-1]
    c2 = w1b_ref.shape[-1]

    # (m, 1) column predicates: position of each row inside its batch element.
    pos = lax.broadcasted_iota(jnp.int32, (m, 1), 0) % lq
    first = pos == 0
    last = pos == lq - 1

    def conv(parts, w_ref, b_ref):
        # im2col matmul (single MXU pass for K = 3*C <= 128) + folded BN + ReLU.
        h = jnp.dot(jnp.concatenate(parts, axis=-1), w_ref[...],
                    preferred_element_type=f32)
        return jnp.maximum(h + b_ref[...], 0.0)

    def prev(v):   # v[t-1] within each batch element, zero halo at t == 0
        return jnp.where(first, 0.0, pltpu.roll(v, 1, 0))

    def nxt(v):    # v[t+1] within each batch element, zero halo at t == lq-1
        return jnp.where(last, 0.0, pltpu.roll(v, m - 1, 0))

    x0 = x0_ref[...].astype(f32)
    x1 = x1_ref[...].astype(f32)
    x2 = x2_ref[...].astype(f32)
    x3 = x3_ref[...].astype(f32)

    # ---- block 0: conv(k3,s2)->BN/ReLU->conv(k3,s1)->BN/ReLU, + maxpool -------
    # conv1 output h (length L/2), produced as even/odd streams (length lq each):
    #   h[2t]   = f(x[4t-1], x[4t],   x[4t+1])
    #   h[2t+1] = f(x[4t+1], x[4t+2], x[4t+3])
    x3p = pltpu.roll(x3, 1, 0)                                  # x[4t-1] (raw)
    he = conv([jnp.where(first, 0.0, x3p), x0, x1], w1a_ref, b1a_ref)
    ho = conv([x1, x2, x3], w1a_ref, b1a_ref)

    # conv2 (stride 1 over h):  y[2t] = g(h[2t-1], h[2t], h[2t+1]),
    #                           y[2t+1] = g(h[2t], h[2t+1], h[2t+2])
    ye = conv([prev(ho), he, ho], w2a_ref, b2a_ref)
    yo = conv([he, ho, nxt(he)], w2a_ref, b2a_ref)

    # MaxPool1d(2, padding=1, dilation=2): sc[j] = max(x[2j-1], x[2j+1]),
    # -inf padding => sc[0] = x[1].  Reuses the conv taps (no extra loads).
    sce = jnp.where(first, x1, jnp.maximum(x3p, x1))            # sc[2t]
    sco = jnp.maximum(x1, x3)                                   # sc[2t+1]

    me = ye + sce                                               # block-0 out, even rows
    mo = yo + sco                                               # block-0 out, odd rows

    # ---- block 1: c1 -> c2 = 2*c1, zero-padded shortcut -----------------------
    mop = pltpu.roll(mo, 1, 0)                                  # mid[2t-1] (raw)
    g = conv([jnp.where(first, 0.0, mop), me, mo], w1b_ref, b1b_ref)   # conv1, s=2
    y1 = conv([prev(g), g, nxt(g)], w2b_ref, b2b_ref)                  # conv2, s=1

    sc1 = jnp.where(first, mo, jnp.maximum(mop, mo))            # maxpool over mid
    sc1 = jnp.concatenate([sc1, jnp.zeros((m, c2 - c1), f32)], axis=-1)  # zeropad()

    # Single full-width store (no partial low-lane re-store).
    o_ref[...] = (y1 + sc1).astype(o_ref.dtype)


def _vmem_capacity_bytes():
    """Best-effort per-core VMEM capacity; conservative default (v7x = 64 MiB)."""
    try:
        info = pltpu.get_tpu_info()
        for name in ("vmem_capacity_bytes", "vmem_size_bytes", "vmem_bytes"):
            v = getattr(info, name, None)
            if v:
                return int(v)
    except Exception:
        pass
    return 64 << 20


def _pick_batch_tile(n, l_in, c_in, vmem_cap):
    """Batch elements per grid step, sized per generation.

    v5e/v6e (128 MiB VMEM, 1 TC): one big block — a 'parallel' axis is just a
    serial loop there, so splitting only adds per-step overhead.
    v7x (64 MiB/TC, 2 TCs): keep >= 2 grid steps so both cores get work, and a
    smaller per-step footprint.
    """
    lq = l_in // 4
    # Rough f32 bytes touched per batch element in one grid step: double-buffered
    # input/output blocks, the 3x im2col temporaries of all four convs, h/mid/g
    # values (c2 = 2*c1) -> ~10x l_in*c_in*4; use 16x for vreg/spill headroom.
    per_elem = l_in * c_in * 4 * 16
    budget = max(vmem_cap // 3, 8 << 20)
    bt = max(1, min(n, budget // max(per_elem, 1)))
    if vmem_cap <= (64 << 20) and n >= 2:          # v7x: feed the 2nd TensorCore
        bt = min(bt, max(1, n // 2))
    for cand in range(bt, 0, -1):                  # divide n, keep rows 8-aligned
        if n % cand == 0 and (cand * lq) % 8 == 0:
            return cand
    return n                                       # full block always legal


def _prep_block_params(params):
    """Fold BN scale into conv weights; flatten weights to im2col (3*Cin, Cout)."""
    w1, s1, b1, w2, s2, b2 = params
    k1, ci1, co1 = w1.shape
    k2, ci2, co2 = w2.shape
    w1f = (w1 * s1[None, None, :]).reshape(k1 * ci1, co1).astype(jnp.float32)
    w2f = (w2 * s2[None, None, :]).reshape(k2 * ci2, co2).astype(jnp.float32)
    return (w1f, b1.reshape(1, co1).astype(jnp.float32),
            w2f, b2.reshape(1, co2).astype(jnp.float32))


def backbone_block_forward(x_ncl, params0, params1, *, b_tile=None):
    """Matches backbone_block.forward: two res blocks (i=0 no pad, i=1 zero pad)."""
    n, c_in, l_in = x_ncl.shape
    if l_in % 4 != 0:
        raise ValueError("sequence length must be divisible by 4")
    c2 = params1[0].shape[2]
    lq = l_in // 4

    vmem_cap = _vmem_capacity_bytes()
    if b_tile is None:
        b_tile = _pick_batch_tile(n, l_in, c_in, vmem_cap)
    if n % b_tile != 0 or ((b_tile * lq) % 8 != 0 and b_tile != n):
        b_tile = n                                   # fall back to a single block
    vmem_limit = max(32 << 20, min((vmem_cap * 3) // 4, 96 << 20))

    w1a, b1a, w2a, b2a = _prep_block_params(params0)
    w1b, b1b, w2b, b2b = _prep_block_params(params1)

    # NCL -> NLC -> deinterleave into 4 sequence phases (one fused XLA relayout).
    x_nlc = jnp.transpose(x_ncl, (0, 2, 1))                      # (n, L, C)
    xp = x_nlc.reshape(n, lq, 4, c_in)
    phases = [xp[:, :, k, :].reshape(n * lq, c_in) for k in range(4)]

    kernel = functools.partial(_backbone_kernel, lq=lq)
    row_in = pl.BlockSpec((b_tile * lq, c_in), lambda i: (i, 0))
    full = lambda a: pl.BlockSpec(a.shape, lambda i: (0,) * a.ndim)

    out2d = pl.pallas_call(
        kernel,
        out_shape=jax.ShapeDtypeStruct((n * lq, c2), jnp.float32),
        grid=(n // b_tile,),
        in_specs=[row_in, row_in, row_in, row_in,
                  full(w1a), full(b1a), full(w2a), full(b2a),
                  full(w1b), full(b1b), full(w2b), full(b2b)],
        out_specs=pl.BlockSpec((b_tile * lq, c2), lambda i: (i, 0)),
        compiler_params=pltpu.CompilerParams(
            dimension_semantics=("parallel",),       # batch tiles split across TCs
            vmem_limit_bytes=int(vmem_limit),
        ),
    )(*phases, w1a, b1a, w2a, b2a, w1b, b1b, w2b, b2b)

    # (n*L/4, C2) -> NCL.  The transpose is required by the module's NCL contract.
    return jnp.transpose(out2d.reshape(n, lq, c2), (0, 2, 1))


# ---------------- deterministic parameter construction (glue) ----------------
def init_resblock_params(key, c_in, c_out, eps=1e-5):
    ks = jax.random.split(key, 12)

    def fold_bn(kg, kb, km, kv, conv_bias, c):
        gamma = 1.0 + 0.1 * jax.random.normal(kg, (c,), jnp.float32)
        beta = 0.1 * jax.random.normal(kb, (c,), jnp.float32)
        mean = 0.1 * jax.random.normal(km, (c,), jnp.float32)
        var = 1.0 + 0.1 * jax.random.uniform(kv, (c,), jnp.float32)
        scale = gamma / jnp.sqrt(var + eps)
        bias = beta + (conv_bias - mean) * scale
        return scale, bias

    w1 = 0.1 * jax.random.normal(ks[0], (3, c_in, c_out), jnp.float32)
    cb1 = 0.1 * jax.random.normal(ks[1], (c_out,), jnp.float32)
    s1, b1 = fold_bn(ks[2], ks[3], ks[4], ks[5], cb1, c_out)

    w2 = 0.1 * jax.random.normal(ks[6], (3, c_out, c_out), jnp.float32)
    cb2 = 0.1 * jax.random.normal(ks[7], (c_out,), jnp.float32)
    s2, b2 = fold_bn(ks[8], ks[9], ks[10], ks[11], cb2, c_out)
    return (w1, s1, b1, w2, s2, b2)


# ---------------------- pure-JAX reference (for checking) --------------------
def _conv1d_nobias_ref(x_ncl, w_kio, stride):
    w_oik = jnp.transpose(w_kio, (2, 1, 0))                      # -> (C_out, C_in, K)
    return lax.conv_general_dilated(
        x_ncl, w_oik, window_strides=(stride,), padding=((1, 1),),
        dimension_numbers=("NCH", "OIH", "NCH"))


def _maxpool_ref(x_ncl):
    return lax.reduce_window(
        x_ncl, -jnp.inf, lax.max,
        window_dimensions=(1, 1, 2), window_strides=(1, 1, 2),
        padding=((0, 0), (0, 0), (1, 1)), window_dilation=(1, 1, 2))


def backbone_block_ref(x_ncl, params0, params1):
    x = x_ncl
    for params, zero_pad in ((params0, False), (params1, True)):
        w1, s1, b1, w2, s2, b2 = params
        shortcut = _maxpool_ref(x)
        y = jnp.maximum(
            _conv1d_nobias_ref(x, w1, 2) * s1[None, :, None] + b1[None, :, None], 0.0)
        y = jnp.maximum(
            _conv1d_nobias_ref(y, w2, 1) * s2[None, :, None] + b2[None, :, None], 0.0)
        if zero_pad:
            shortcut = jnp.concatenate([shortcut, jnp.zeros_like(shortcut)], axis=1)
        x = y + shortcut
    return x


if __name__ == "__main__":
    key = jax.random.PRNGKey(0)
    kx, k0, k1 = jax.random.split(key, 3)

    N, C, L = 2, 32, 16                                          # start_channel = 32
    x = jax.random.normal(kx, (N, C, L), jnp.float32)

    params0 = init_resblock_params(k0, 32, 32)                   # i=0: 32 -> 32
    params1 = init_resblock_params(k1, 32, 64)                   # i=1: 32 -> 64 (zero_pad)

    fwd = jax.jit(backbone_block_forward)                        # fuses transpose+deinterleave
    out = jax.block_until_ready(fwd(x, params0, params1))
    ref = backbone_block_ref(x, params0, params1)

    assert out.shape == (N, 64, L // 4), out.shape
    if not jnp.allclose(out, ref, atol=1e-4, rtol=1e-4):
        raise AssertionError("Pallas kernel does not match JAX reference")
    print("KERNEL_OK")
</pallas_src>

<mosaic_0001>
module attributes {stable_mosaic.version = 11 : i64} {
  func.func @_backbone_kernel(%arg0: i32, %arg1: memref<8x32xf32, #tpu.memory_space<vmem>>, %arg2: memref<8x32xf32, #tpu.memory_space<vmem>>, %arg3: memref<8x32xf32, #tpu.memory_space<vmem>>, %arg4: memref<8x32xf32, #tpu.memory_space<vmem>>, %arg5: memref<96x32xf32, #tpu.memory_space<vmem>>, %arg6: memref<1x32xf32, #tpu.memory_space<vmem>>, %arg7: memref<96x32xf32, #tpu.memory_space<vmem>>, %arg8: memref<1x32xf32, #tpu.memory_space<vmem>>, %arg9: memref<96x64xf32, #tpu.memory_space<vmem>>, %arg10: memref<1x64xf32, #tpu.memory_space<vmem>>, %arg11: memref<192x64xf32, #tpu.memory_space<vmem>>, %arg12: memref<1x64xf32, #tpu.memory_space<vmem>>, %arg13: memref<8x64xf32, #tpu.memory_space<vmem>>) attributes {dimension_semantics = [#tpu.dimension_semantics<parallel>], iteration_bounds = array<i64: 1>, scalar_prefetch = 0 : i64, scratch_operands = 0 : i64, tpu.core_type = #tpu.core_type<tc>, window_params = [{transform_indices = @transform_0, window_bounds = array<i64: 8, 32>}, {transform_indices = @transform_1, window_bounds = array<i64: 8, 32>}, {transform_indices = @transform_2, window_bounds = array<i64: 8, 32>}, {transform_indices = @transform_3, window_bounds = array<i64: 8, 32>}, {pipeline_mode = #tpu.pipeline_mode<synchronous>, transform_indices = @transform_4, window_bounds = array<i64: 96, 32>}, {pipeline_mode = #tpu.pipeline_mode<synchronous>, transform_indices = @transform_5, window_bounds = array<i64: 1, 32>}, {pipeline_mode = #tpu.pipeline_mode<synchronous>, transform_indices = @transform_6, window_bounds = array<i64: 96, 32>}, {pipeline_mode = #tpu.pipeline_mode<synchronous>, transform_indices = @transform_7, window_bounds = array<i64: 1, 32>}, {pipeline_mode = #tpu.pipeline_mode<synchronous>, transform_indices = @transform_8, window_bounds = array<i64: 96, 64>}, {pipeline_mode = #tpu.pipeline_mode<synchronous>, transform_indices = @transform_9, window_bounds = array<i64: 1, 64>}, {pipeline_mode = #tpu.pipeline_mode<synchronous>, transform_indices = @transform_10, window_bounds = array<i64: 192, 64>}, {pipeline_mode = #tpu.pipeline_mode<synchronous>, transform_indices = @transform_11, window_bounds = array<i64: 1, 64>}, {transform_indices = @transform_12, window_bounds = array<i64: 8, 64>}]} {
    %0 = tpu.iota {dimensions = array<i32: 0>} : vector<8x1xi32>
    %c4_i32 = arith.constant 4 : i32
    %c0_i32 = arith.constant 0 : i32
    %1 = arith.cmpi eq, %c4_i32, %c0_i32 : i32
    %c1_i32 = arith.constant 1 : i32
    %2 = arith.select %1, %c1_i32, %c4_i32 : i32
    %3 = vector.broadcast %2 : i32 to vector<8x1xi32>
    %4 = arith.remsi %0, %3 : vector<8x1xi32>
    %c0_i32_0 = arith.constant 0 : i32
    %5 = vector.broadcast %c0_i32_0 : i32 to vector<8x1xi32>
    %6 = arith.cmpi ne, %4, %5 : vector<8x1xi32>
    %c0_i32_1 = arith.constant 0 : i32
    %7 = vector.broadcast %c0_i32_1 : i32 to vector<8x1xi32>
    %8 = arith.cmpi slt, %4, %7 : vector<8x1xi32>
    %c0_i32_2 = arith.constant 0 : i32
    %9 = arith.cmpi slt, %2, %c0_i32_2 : i32
    %10 = vector.broadcast %9 : i1 to vector<8x1xi1>
    %11 = vector.broadcast %10 : vector<8x1xi1> to vector<8x1xi1>
    %12 = arith.xori %8, %11 : vector<8x1xi1>
    %13 = arith.andi %12, %6 : vector<8x1xi1>
    %14 = vector.broadcast %2 : i32 to vector<8x1xi32>
    %15 = arith.addi %4, %14 : vector<8x1xi32>
    %16 = arith.select %13, %15, %4 : vector<8x1xi1>, vector<8x1xi32>
    %c0_i32_3 = arith.constant 0 : i32
    %17 = vector.broadcast %c0_i32_3 : i32 to vector<8x1xi32>
    %18 = arith.cmpi eq, %16, %17 : vector<8x1xi32>
    %c3_i32 = arith.constant 3 : i32
    %19 = vector.broadcast %c3_i32 : i32 to vector<8x1xi32>
    %20 = arith.cmpi eq, %16, %19 : vector<8x1xi32>
    %c0 = arith.constant 0 : index
    %c0_4 = arith.constant 0 : index
    %21 = vector.load %arg1[%c0, %c0_4] : memref<8x32xf32, #tpu.memory_space<vmem>>, vector<8x32xf32>
    %c0_5 = arith.constant 0 : index
    %c0_6 = arith.constant 0 : index
    %22 = vector.load %arg2[%c0_5, %c0_6] : memref<8x32xf32, #tpu.memory_space<vmem>>, vector<8x32xf32>
    %c0_7 = arith.constant 0 : index
    %c0_8 = arith.constant 0 : index
    %23 = vector.load %arg3[%c0_7, %c0_8] : memref<8x32xf32, #tpu.memory_space<vmem>>, vector<8x32xf32>
    %c0_9 = arith.constant 0 : index
    %c0_10 = arith.constant 0 : index
    %24 = vector.load %arg4[%c0_9, %c0_10] : memref<8x32xf32, #tpu.memory_space<vmem>>, vector<8x32xf32>
    %c1_i32_11 = arith.constant 1 : i32
    %25 = tpu.dynamic_rotate %24 by %c1_i32_11 dim 0 : vector<8x32xf32>, i32 -> vector<8x32xf32>
    %cst = arith.constant 0.000000e+00 : f32
    %26 = vector.shape_cast %18 : vector<8x1xi1> to vector<8x1xi1>
    %27 = vector.broadcast %26 : vector<8x1xi1> to vector<8x32xi1>
    %28 = vector.broadcast %cst : f32 to vector<8x32xf32>
    %29 = arith.select %27, %28, %25 : vector<8x32xi1>, vector<8x32xf32>
    %30 = tpu.concatenate %29, %21, %22 in 1 : vector<8x32xf32>, vector<8x32xf32>, vector<8x32xf32> -> vector<8x96xf32>
    %c0_12 = arith.constant 0 : index
    %c0_13 = arith.constant 0 : index
    %31 = vector.load %arg5[%c0_12, %c0_13] : memref<96x32xf32, #tpu.memory_space<vmem>>, vector<96x32xf32>
    %cst_14 = arith.constant dense<0.000000e+00> : vector<8x32xf32>
    %32 = tpu.matmul %30, %31, %cst_14 {dimension_numbers = #tpu.dot_dimension_numbers<[1], [0], [0], [1], [0, 0, 1, 1], [], []>} : vector<8x96xf32>, vector<96x32xf32>, vector<8x32xf32> -> vector<8x32xf32>
    %c0_15 = arith.constant 0 : index
    %c0_16 = arith.constant 0 : index
    %33 = vector.load %arg6[%c0_15, %c0_16] : memref<1x32xf32, #tpu.memory_space<vmem>>, vector<1x32xf32>
    %34 = vector.broadcast %33 : vector<1x32xf32> to vector<8x32xf32>
    %35 = arith.addf %32, %34 : vector<8x32xf32>
    %cst_17 = arith.constant 0.000000e+00 : f32
    %36 = vector.broadcast %cst_17 : f32 to vector<8x32xf32>
    %37 = arith.maximumf %35, %36 : vector<8x32xf32>
    %38 = tpu.concatenate %22, %23, %24 in 1 : vector<8x32xf32>, vector<8x32xf32>, vector<8x32xf32> -> vector<8x96xf32>
    %c0_18 = arith.constant 0 : index
    %c0_19 = arith.constant 0 : index
    %39 = vector.load %arg5[%c0_18, %c0_19] : memref<96x32xf32, #tpu.memory_space<vmem>>, vector<96x32xf32>
    %cst_20 = arith.constant dense<0.000000e+00> : vector<8x32xf32>
    %40 = tpu.matmul %38, %39, %cst_20 {dimension_numbers = #tpu.dot_dimension_numbers<[1], [0], [0], [1], [0, 0, 1, 1], [], []>} : vector<8x96xf32>, vector<96x32xf32>, vector<8x32xf32> -> vector<8x32xf32>
    %c0_21 = arith.constant 0 : index
    %c0_22 = arith.constant 0 : index
    %41 = vector.load %arg6[%c0_21, %c0_22] : memref<1x32xf32, #tpu.memory_space<vmem>>, vector<1x32xf32>
    %42 = vector.broadcast %41 : vector<1x32xf32> to vector<8x32xf32>
    %43 = arith.addf %40, %42 : vector<8x32xf32>
    %cst_23 = arith.constant 0.000000e+00 : f32
    %44 = vector.broadcast %cst_23 : f32 to vector<8x32xf32>
    %45 = arith.maximumf %43, %44 : vector<8x32xf32>
    %c1_i32_24 = arith.constant 1 : i32
    %46 = tpu.dynamic_rotate %45 by %c1_i32_24 dim 0 : vector<8x32xf32>, i32 -> vector<8x32xf32>
    %cst_25 = arith.constant 0.000000e+00 : f32
    %47 = vector.shape_cast %18 : vector<8x1xi1> to vector<8x1xi1>
    %48 = vector.broadcast %47 : vector<8x1xi1> to vector<8x32xi1>
    %49 = vector.broadcast %cst_25 : f32 to vector<8x32xf32>
    %50 = arith.select %48, %49, %46 : vector<8x32xi1>, vector<8x32xf32>
    %51 = tpu.concatenate %50, %37, %45 in 1 : vector<8x32xf32>, vector<8x32xf32>, vector<8x32xf32> -> vector<8x96xf32>
    %c0_26 = arith.constant 0 : index
    %c0_27 = arith.constant 0 : index
    %52 = vector.load %arg7[%c0_26, %c0_27] : memref<96x32xf32, #tpu.memory_space<vmem>>, vector<96x32xf32>
    %cst_28 = arith.constant dense<0.000000e+00> : vector<8x32xf32>
    %53 = tpu.matmul %51, %52, %cst_28 {dimension_numbers = #tpu.dot_dimension_numbers<[1], [0], [0], [1], [0, 0, 1, 1], [], []>} : vector<8x96xf32>, vector<96x32xf32>, vector<8x32xf32> -> vector<8x32xf32>
    %c0_29 = arith.constant 0 : index
    %c0_30 = arith.constant 0 : index
    %54 = vector.load %arg8[%c0_29, %c0_30] : memref<1x32xf32, #tpu.memory_space<vmem>>, vector<1x32xf32>
    %55 = vector.broadcast %54 : vector<1x32xf32> to vector<8x32xf32>
    %56 = arith.addf %53, %55 : vector<8x32xf32>
    %cst_31 = arith.constant 0.000000e+00 : f32
    %57 = vector.broadcast %cst_31 : f32 to vector<8x32xf32>
    %58 = arith.maximumf %56, %57 : vector<8x32xf32>
    %c7_i32 = arith.constant 7 : i32
    %59 = tpu.dynamic_rotate %37 by %c7_i32 dim 0 : vector<8x32xf32>, i32 -> vector<8x32xf32>
    %cst_32 = arith.constant 0.000000e+00 : f32
    %60 = vector.shape_cast %20 : vector<8x1xi1> to vector<8x1xi1>
    %61 = vector.broadcast %60 : vector<8x1xi1> to vector<8x32xi1>
    %62 = vector.broadcast %cst_32 : f32 to vector<8x32xf32>
    %63 = arith.select %61, %62, %59 : vector<8x32xi1>, vector<8x32xf32>
    %64 = tpu.concatenate %37, %45, %63 in 1 : vector<8x32xf32>, vector<8x32xf32>, vector<8x32xf32> -> vector<8x96xf32>
    %c0_33 = arith.constant 0 : index
    %c0_34 = arith.constant 0 : index
    %65 = vector.load %arg7[%c0_33, %c0_34] : memref<96x32xf32, #tpu.memory_space<vmem>>, vector<96x32xf32>
    %cst_35 = arith.constant dense<0.000000e+00> : vector<8x32xf32>
    %66 = tpu.matmul %64, %65, %cst_35 {dimension_numbers = #tpu.dot_dimension_numbers<[1], [0], [0], [1], [0, 0, 1, 1], [], []>} : vector<8x96xf32>, vector<96x32xf32>, vector<8x32xf32> -> vector<8x32xf32>
    %c0_36 = arith.constant 0 : index
    %c0_37 = arith.constant 0 : index
    %67 = vector.load %arg8[%c0_36, %c0_37] : memref<1x32xf32, #tpu.memory_space<vmem>>, vector<1x32xf32>
    %68 = vector.broadcast %67 : vector<1x32xf32> to vector<8x32xf32>
    %69 = arith.addf %66, %68 : vector<8x32xf32>
    %cst_38 = arith.constant 0.000000e+00 : f32
    %70 = vector.broadcast %cst_38 : f32 to vector<8x32xf32>
    %71 = arith.maximumf %69, %70 : vector<8x32xf32>
    %72 = arith.maximumf %25, %22 : vector<8x32xf32>
    %73 = vector.shape_cast %18 : vector<8x1xi1> to vector<8x1xi1>
    %74 = vector.broadcast %73 : vector<8x1xi1> to vector<8x32xi1>
    %75 = arith.select %74, %22, %72 : vector<8x32xi1>, vector<8x32xf32>
    %76 = arith.maximumf %22, %24 : vector<8x32xf32>
    %77 = arith.addf %58, %75 : vector<8x32xf32>
    %78 = arith.addf %71, %76 : vector<8x32xf32>
    %c1_i32_39 = arith.constant 1 : i32
    %79 = tpu.dynamic_rotate %78 by %c1_i32_39 dim 0 : vector<8x32xf32>, i32 -> vector<8x32xf32>
    %cst_40 = arith.constant 0.000000e+00 : f32
    %80 = vector.shape_cast %18 : vector<8x1xi1> to vector<8x1xi1>
    %81 = vector.broadcast %80 : vector<8x1xi1> to vector<8x32xi1>
    %82 = vector.broadcast %cst_40 : f32 to vector<8x32xf32>
    %83 = arith.select %81, %82, %79 : vector<8x32xi1>, vector<8x32xf32>
    %84 = tpu.concatenate %83, %77, %78 in 1 : vector<8x32xf32>, vector<8x32xf32>, vector<8x32xf32> -> vector<8x96xf32>
    %c0_41 = arith.constant 0 : index
    %c0_42 = arith.constant 0 : index
    %85 = vector.load %arg9[%c0_41, %c0_42] : memref<96x64xf32, #tpu.memory_space<vmem>>, vector<96x64xf32>
    %cst_43 = arith.constant dense<0.000000e+00> : vector<8x64xf32>
    %86 = tpu.matmul %84, %85, %cst_43 {dimension_numbers = #tpu.dot_dimension_numbers<[1], [0], [0], [1], [0, 0, 1, 1], [], []>} : vector<8x96xf32>, vector<96x64xf32>, vector<8x64xf32> -> vector<8x64xf32>
    %c0_44 = arith.constant 0 : index
    %c0_45 = arith.constant 0 : index
    %87 = vector.load %arg10[%c0_44, %c0_45] : memref<1x64xf32, #tpu.memory_space<vmem>>, vector<1x64xf32>
    %88 = vector.broadcast %87 : vector<1x64xf32> to vector<8x64xf32>
    %89 = arith.addf %86, %88 : vector<8x64xf32>
    %cst_46 = arith.constant 0.000000e+00 : f32
    %90 = vector.broadcast %cst_46 : f32 to vector<8x64xf32>
    %91 = arith.maximumf %89, %90 : vector<8x64xf32>
    %c1_i32_47 = arith.constant 1 : i32
    %92 = tpu.dynamic_rotate %91 by %c1_i32_47 dim 0 : vector<8x64xf32>, i32 -> vector<8x64xf32>
    %cst_48 = arith.constant 0.000000e+00 : f32
    %93 = vector.shape_cast %18 : vector<8x1xi1> to vector<8x1xi1>
    %94 = vector.broadcast %93 : vector<8x1xi1> to vector<8x64xi1>
    %95 = vector.broadcast %cst_48 : f32 to vector<8x64xf32>
    %96 = arith.select %94, %95, %92 : vector<8x64xi1>, vector<8x64xf32>
    %c7_i32_49 = arith.constant 7 : i32
    %97 = tpu.dynamic_rotate %91 by %c7_i32_49 dim 0 : vector<8x64xf32>, i32 -> vector<8x64xf32>
    %cst_50 = arith.constant 0.000000e+00 : f32
    %98 = vector.shape_cast %20 : vector<8x1xi1> to vector<8x1xi1>
    %99 = vector.broadcast %98 : vector<8x1xi1> to vector<8x64xi1>
    %100 = vector.broadcast %cst_50 : f32 to vector<8x64xf32>
    %101 = arith.select %99, %100, %97 : vector<8x64xi1>, vector<8x64xf32>
    %102 = tpu.concatenate %96, %91, %101 in 1 : vector<8x64xf32>, vector<8x64xf32>, vector<8x64xf32> -> vector<8x192xf32>
    %c0_51 = arith.constant 0 : index
    %c0_52 = arith.constant 0 : index
    %103 = vector.load %arg11[%c0_51, %c0_52] : memref<192x64xf32, #tpu.memory_space<vmem>>, vector<192x64xf32>
    %cst_53 = arith.constant dense<0.000000e+00> : vector<8x64xf32>
    %104 = tpu.matmul %102, %103, %cst_53 {dimension_numbers = #tpu.dot_dimension_numbers<[1], [0], [0], [1], [0, 0, 1, 1], [], []>} : vector<8x192xf32>, vector<192x64xf32>, vector<8x64xf32> -> vector<8x64xf32>
    %c0_54 = arith.constant 0 : index
    %c0_55 = arith.constant 0 : index
    %105 = vector.load %arg12[%c0_54, %c0_55] : memref<1x64xf32, #tpu.memory_space<vmem>>, vector<1x64xf32>
    %106 = vector.broadcast %105 : vector<1x64xf32> to vector<8x64xf32>
    %107 = arith.addf %104, %106 : vector<8x64xf32>
    %cst_56 = arith.constant 0.000000e+00 : f32
    %108 = vector.broadcast %cst_56 : f32 to vector<8x64xf32>
    %109 = arith.maximumf %107, %108 : vector<8x64xf32>
    %110 = arith.maximumf %79, %78 : vector<8x32xf32>
    %111 = vector.shape_cast %18 : vector<8x1xi1> to vector<8x1xi1>
    %112 = vector.broadcast %111 : vector<8x1xi1> to vector<8x32xi1>
    %113 = arith.select %112, %78, %110 : vector<8x32xi1>, vector<8x32xf32>
    %cst_57 = arith.constant 0.000000e+00 : f32
    %114 = vector.broadcast %cst_57 : f32 to vector<8x32xf32>
    %115 = tpu.concatenate %113, %114 in 1 : vector<8x32xf32>, vector<8x32xf32> -> vector<8x64xf32>
    %116 = arith.addf %109, %115 : vector<8x64xf32>
    %c0_58 = arith.constant 0 : index
    %c0_59 = arith.constant 0 : index
    %117 = vector.load %arg13[%c0_58, %c0_59] : memref<8x64xf32, #tpu.memory_space<vmem>>, vector<8x64xf32>
    tpu.vector_store %arg13[%c0_58, %c0_59], %116 {strides = array<i32>} : memref<8x64xf32, #tpu.memory_space<vmem>>, vector<8x64xf32>,
    return
  }
  func.func @transform_0(%arg0: i32) -> (i32, i32) {
    %c0_i32 = arith.constant 0 : i32
    %c0_i32_0 = arith.constant 0 : i32
    return %arg0, %c0_i32 : i32, i32
  }
  func.func @transform_1(%arg0: i32) -> (i32, i32) {
    %c0_i32 = arith.constant 0 : i32
    %c0_i32_0 = arith.constant 0 : i32
    return %arg0, %c0_i32 : i32, i32
  }
  func.func @transform_2(%arg0: i32) -> (i32, i32) {
    %c0_i32 = arith.constant 0 : i32
    %c0_i32_0 = arith.constant 0 : i32
    return %arg0, %c0_i32 : i32, i32
  }
  func.func @transform_3(%arg0: i32) -> (i32, i32) {
    %c0_i32 = arith.constant 0 : i32
    %c0_i32_0 = arith.constant 0 : i32
    return %arg0, %c0_i32 : i32, i32
  }
  func.func @transform_4(%arg0: i32) -> (i32, i32) {
    %c0_i32 = arith.constant 0 : i32
    %c0_i32_0 = arith.constant 0 : i32
    %c0_i32_1 = arith.constant 0 : i32
    return %c0_i32, %c0_i32_0 : i32, i32
  }
  func.func @transform_5(%arg0: i32) -> (i32, i32) {
    %c0_i32 = arith.constant 0 : i32
    %c0_i32_0 = arith.constant 0 : i32
    %c0_i32_1 = arith.constant 0 : i32
    return %c0_i32, %c0_i32_0 : i32, i32
  }
  func.func @transform_6(%arg0: i32) -> (i32, i32) {
    %c0_i32 = arith.constant 0 : i32
    %c0_i32_0 = arith.constant 0 : i32
    %c0_i32_1 = arith.constant 0 : i32
    return %c0_i32, %c0_i32_0 : i32, i32
  }
  func.func @transform_7(%arg0: i32) -> (i32, i32) {
    %c0_i32 = arith.constant 0 : i32
    %c0_i32_0 = arith.constant 0 : i32
    %c0_i32_1 = arith.constant 0 : i32
    return %c0_i32, %c0_i32_0 : i32, i32
  }
  func.func @transform_8(%arg0: i32) -> (i32, i32) {
    %c0_i32 = arith.constant 0 : i32
    %c0_i32_0 = arith.constant 0 : i32
    %c0_i32_1 = arith.constant 0 : i32
    return %c0_i32, %c0_i32_0 : i32, i32
  }
  func.func @transform_9(%arg0: i32) -> (i32, i32) {
    %c0_i32 = arith.constant 0 : i32
    %c0_i32_0 = arith.constant 0 : i32
    %c0_i32_1 = arith.constant 0 : i32
    return %c0_i32, %c0_i32_0 : i32, i32
  }
  func.func @transform_10(%arg0: i32) -> (i32, i32) {
    %c0_i32 = arith.constant 0 : i32
    %c0_i32_0 = arith.constant 0 : i32
    %c0_i32_1 = arith.constant 0 : i32
    return %c0_i32, %c0_i32_0 : i32, i32
  }
  func.func @transform_11(%arg0: i32) -> (i32, i32) {
    %c0_i32 = arith.constant 0 : i32
    %c0_i32_0 = arith.constant 0 : i32
    %c0_i32_1 = arith.constant 0 : i32
    return %c0_i32, %c0_i32_0 : i32, i32
  }
  func.func @transform_12(%arg0: i32) -> (i32, i32) {
    %c0_i32 = arith.constant 0 : i32
    %c0_i32_0 = arith.constant 0 : i32
    return %arg0, %c0_i32 : i32, i32
  }
}

</mosaic_0001>

<llo_original>
// kernel: backbone_block_forward.1
$region0: #{backbone_block_forward.1}
  #allocation0 [shape = 'u32[]', space=smem, size = 0x4, offset = 0x4, fixed_abs, tag = 'smem constant byte address 0x4 - core index']
  #allocation1 [shape = 'u32[72,128]{1,0:T(1,128)}', space=vmem, size = 0x9000, scoped, tag = 'internal scratch']
  %s0 = inlined_call_operand.vmem [shape: f32[8,32], index: 0, kind: input, shape index: {}]
  %s1 = inlined_call_operand.vmem [shape: f32[8,32], index: 1, kind: input, shape index: {}]
  %s2 = inlined_call_operand.vmem [shape: f32[8,32], index: 2, kind: input, shape index: {}]
  %s3 = inlined_call_operand.vmem [shape: f32[8,32], index: 3, kind: input, shape index: {}]
  %s4 = inlined_call_operand.vmem [shape: f32[96,32], index: 4, kind: input, shape index: {}]
  %s5 = inlined_call_operand.vmem [shape: f32[1,32], index: 5, kind: input, shape index: {}]
  %s6 = inlined_call_operand.vmem [shape: f32[96,32], index: 6, kind: input, shape index: {}]
  %s7 = inlined_call_operand.vmem [shape: f32[1,32], index: 7, kind: input, shape index: {}]
  %s8 = inlined_call_operand.vmem [shape: f32[96,64], index: 8, kind: input, shape index: {}]
  %s9 = inlined_call_operand.vmem [shape: f32[1,64], index: 9, kind: input, shape index: {}]
  %s10 = inlined_call_operand.vmem [shape: f32[192,64], index: 10, kind: input, shape index: {}]
  %s11 = inlined_call_operand.vmem [shape: f32[1,64], index: 11, kind: input, shape index: {}]
  %s12 = inlined_call_operand.hbm [shape: f32[8,64], index: 12, kind: output, shape index: {}]
  %s13 = sld [smem:[#allocation0]]
  $region58: #{backbone_block_forward.1} parent=0
    _
  %s15 = ssub.s32 1, %s13
  %s16 = scalar_select 0, %s15, %s13
  $region1: #{backbone_block_forward.1} parent=0
    #allocation2 [shape = 'u8[4096]{0}', space=vmem, size = 0x1000, scoped, tag = 'output window, operand 0, single buffered']
    #allocation3 [shape = 's32[1]{0}', space=sflag, size = 0x4, scoped, tag = 'scoped memory for backbone_block_forward.1']
    %17 = vsyncpa [#allocation3], 0
    // Predicated region
    $region2: #{backbone_block_forward.1} parent=1 // pred_check
      _
    $region3: #{backbone_block_forward.1} parent=1 // pred_check_branch
      %19 = sbr.rel (0) target = $region5
    $region4: #{backbone_block_forward.1} parent=1 // pred_region
      _
    $region5: #{backbone_block_forward.1} parent=1 // pred_fallthru
      _
    // Predicated region
    $region6: #{backbone_block_forward.1} parent=1 // pred_check
      _
    $region7: #{backbone_block_forward.1} parent=1 // pred_check_branch
      %21 = sbr.rel (0) target = $region9
    $region8: #{backbone_block_forward.1} parent=1 // pred_region
      _
    $region9: #{backbone_block_forward.1} parent=1 // pred_fallthru
      _
    // Predicated region
    $region10: #{backbone_block_forward.1} parent=1 // pred_check
      _
    $region11: #{backbone_block_forward.1} parent=1 // pred_check_branch
      %23 = sbr.rel (0) target = $region13
    $region12: #{backbone_block_forward.1} parent=1 // pred_region
      _
    $region13: #{backbone_block_forward.1} parent=1 // pred_fallthru
      _
    // Predicated region
    $region14: #{backbone_block_forward.1} parent=1 // pred_check
      _
    $region15: #{backbone_block_forward.1} parent=1 // pred_check_branch
      %25 = sbr.rel (0) target = $region17
    $region16: #{backbone_block_forward.1} parent=1 // pred_region
      _
    $region17: #{backbone_block_forward.1} parent=1 // pred_fallthru
      _
    // Predicated region
    $region18: #{backbone_block_forward.1} parent=1 // pred_check
      _
    $region19: #{backbone_block_forward.1} parent=1 // pred_check_branch
      %27 = sbr.rel (0) target = $region21
    $region20: #{backbone_block_forward.1} parent=1 // pred_region
      _
    $region21: #{backbone_block_forward.1} parent=1 // pred_fallthru
      _
    // Predicated region
    $region22: #{backbone_block_forward.1} parent=1 // pred_check
      _
    $region23: #{backbone_block_forward.1} parent=1 // pred_check_branch
      %29 = sbr.rel (0) target = $region25
    $region24: #{backbone_block_forward.1} parent=1 // pred_region
      _
    $region25: #{backbone_block_forward.1} parent=1 // pred_fallthru
      _
    // Predicated region
    $region26: #{backbone_block_forward.1} parent=1 // pred_check
      _
    $region27: #{backbone_block_forward.1} parent=1 // pred_check_branch
      %31 = sbr.rel (0) target = $region29
    $region28: #{backbone_block_forward.1} parent=1 // pred_region
      _
    $region29: #{backbone_block_forward.1} parent=1 // pred_fallthru
      _
    // Predicated region
    $region30: #{backbone_block_forward.1} parent=1 // pred_check
      _
    $region31: #{backbone_block_forward.1} parent=1 // pred_check_branch
      %33 = sbr.rel (0) target = $region33
    $region32: #{backbone_block_forward.1} parent=1 // pred_region
      _
    $region33: #{backbone_block_forward.1} parent=1 // pred_fallthru
      _
    // Predicated region
    $region34: #{backbone_block_forward.1} parent=1 // pred_check
      _
    $region35: #{backbone_block_forward.1} parent=1 // pred_check_branch
      %35 = sbr.rel (0) target = $region37
    $region36: #{backbone_block_forward.1} parent=1 // pred_region
      _
    $region37: #{backbone_block_forward.1} parent=1 // pred_fallthru
      _
    // Predicated region
    $region38: #{backbone_block_forward.1} parent=1 // pred_check
      _
    $region39: #{backbone_block_forward.1} parent=1 // pred_check_branch
      %37 = sbr.rel (0) target = $region41
    $region40: #{backbone_block_forward.1} parent=1 // pred_region
      _
    $region41: #{backbone_block_forward.1} parent=1 // pred_fallthru
      _
    // Predicated region
    $region42: #{backbone_block_forward.1} parent=1 // pred_check
      _
    $region43: #{backbone_block_forward.1} parent=1 // pred_check_branch
      %39 = sbr.rel (0) target = $region45
    $region44: #{backbone_block_forward.1} parent=1 // pred_region
      _
    $region45: #{backbone_block_forward.1} parent=1 // pred_fallthru
      _
    // Predicated region
    $region46: #{backbone_block_forward.1} parent=1 // pred_check
      _
    $region47: #{backbone_block_forward.1} parent=1 // pred_check_branch
      %41 = sbr.rel (0) target = $region49
    $region48: #{backbone_block_forward.1} parent=1 // pred_region
      _
    $region49: #{backbone_block_forward.1} parent=1 // pred_fallthru
      _
    %v42 = vlaneseq
    %v43 = vshrl.u32 %v42, 7
    %vm44 = vcmp.lt.s32.totalorder %v43, 0
    %v45 = vsub.s32 0, %v43
    %v46 = vsel %vm44, %v45, %v43
    %v47 = vshrl.u32 %v46, 2
    %v48 = vand.u32 %v46, 3
    %v49 = vsub.s32 0, %v48
    %v50 = vsel %vm44, %v49, %v48
    %vm51 = vcmp.ne.s32.totalorder %v50, 0
    %vm52 = vcmp.lt.s32.totalorder %v50, 0
    %vm53 = vmand %vm52, %vm51
    %v54 = vadd.s32 %v50, 4
    %v55 = vsel %vm53, %v54, %v50
    %vm56 = vcmp.eq.s32.totalorder %v55, 0
    %vm57 = vcmp.eq.s32.totalorder %v55, 3
    %v58 = vld [vmem:[%s0] sm:$0xff]
    %v59 = vld [vmem:[%s1] sm:$0xff]
    %v60 = vld [vmem:[%s2] sm:$0xff]
    %v61 = vld [vmem:[%s3] sm:$0xff]
    %v62 = vrot.slane %v61, 7
    %v63 = vsel %vm56, 1, 0
    %vm64 = vcmp.eq.s32.totalorder %v63, 1
    %v65 = vsel %vm64, 0.0, %v62
    %67 = vrot.lane.b32.xlu0 %v58, 32
    %v68 = vpop.permute.xlu0 %67
    %71 = vrot.lane.b32.xlu0 %v59, 64
    %v72 = vpop.permute.xlu0 %71
    %vm74 = vcmask 261120
    %v75 = vsel %vm74, %v65, %v68
    %vm76 = vcmask 523264
    %v77 = vsel %vm76, %v75, %v72
    %v78 = vld [vmem:[%s4] sm:$0xff]
    %v79 = vld [vmem:[%s4 + $0x8] sm:$0xff]
    %v80 = vld [vmem:[%s4 + $0x10] sm:$0xff]
    %v81 = vld [vmem:[%s4 + $0x18] sm:$0xff]
    %v82 = vld [vmem:[%s4 + $0x20] sm:$0xff]
    %v83 = vld [vmem:[%s4 + $0x28] sm:$0xff]
    %v84 = vld [vmem:[%s4 + $0x30] sm:$0xff]
    %v85 = vld [vmem:[%s4 + $0x38] sm:$0xff]
    %v86 = vld [vmem:[%s4 + $0x40] sm:$0xff]
    %v87 = vld [vmem:[%s4 + $0x48] sm:$0xff]
    %v88 = vld [vmem:[%s4 + $0x50] sm:$0xff]
    %v89 = vld [vmem:[%s4 + $0x58] sm:$0xff]
    %v90 = vld [vmem:[%s5] sm:$0x1]
    %v92 = vperm.slane %v90, 0
    %vm94 = vcmask 785408
    %v96 = vsel %vm94, %v77, 0
    %98 = vmatpush.msra.mxu0 0.0
    %99 = vmatpush.msra.mxu0 0.0
    %100 = vmatpush.msra.mxu0 0.0
    %101 = vmatpush.msra.mxu0 0.0
    %102 = vmatpush.msra.mxu0 %v89
    %103 = vmatpush.msra.mxu0 %v88
    %104 = vmatpush.msra.mxu0 %v87
    %105 = vmatpush.msra.mxu0 %v86
    %106 = vmatpush.msra.mxu0 %v85
    %107 = vmatpush.msra.mxu0 %v84
    %108 = vmatpush.msra.mxu0 %v83
    %109 = vmatpush.msra.mxu0 %v82
    %110 = vmatpush.msra.mxu0 %v81
    %111 = vmatpush.msra.mxu0 %v80
    %112 = vmatpush.msra.mxu0 %v79
    %113 = vmatpush.msra.mxu0 %v78
    %114 = vmatmul.f32.gmra.mxu0 %v96
    %v115 = vpop.f32.mrf.mxu0
    %v116 = vadd.f32 %v92, %v115
    %117 = vdwg.mxu0
    %v118 = vmax.f32 %v116, 0.0
    %120 = vrot.lane.b32.xlu0 %v60, 32
    %v121 = vpop.permute.xlu0 %120
    %124 = vrot.lane.b32.xlu0 %v61, 64
    %v125 = vpop.permute.xlu0 %124
    %v127 = vsel %vm74, %v59, %v121
    %v128 = vsel %vm76, %v127, %v125
    %v130 = vsel %vm94, %v128, 0
    %132 = vmatpush.msra.mxu0 0.0
    %133 = vmatpush.msra.mxu0 0.0
    %134 = vmatpush.msra.mxu0 0.0
    %135 = vmatpush.msra.mxu0 0.0
    %136 = vmatpush.msra.mxu0 %v89
    %137 = vmatpush.msra.mxu0 %v88
    %138 = vmatpush.msra.mxu0 %v87
    %139 = vmatpush.msra.mxu0 %v86
    %140 = vmatpush.msra.mxu0 %v85
    %141 = vmatpush.msra.mxu0 %v84
    %142 = vmatpush.msra.mxu0 %v83
    %143 = vmatpush.msra.mxu0 %v82
    %144 = vmatpush.msra.mxu0 %v81
    %145 = vmatpush.msra.mxu0 %v80
    %146 = vmatpush.msra.mxu0 %v79
    %147 = vmatpush.msra.mxu0 %v78
    %148 = vmatmul.f32.gmra.mxu0 %v130
    %v149 = vpop.f32.mrf.mxu0
    %v150 = vadd.f32 %v92, %v149
    %151 = vdwg.mxu0
    %v152 = vmax.f32 %v150, 0.0
    %v153 = vrot.slane %v152, 7
    %v154 = vsel %vm64, 0.0, %v153
    %156 = vrot.lane.b32.xlu0 %v118, 32
    %v157 = vpop.permute.xlu0 %156
    %160 = vrot.lane.b32.xlu0 %v152, 64
    %v161 = vpop.permute.xlu0 %160
    %v163 = vsel %vm74, %v154, %v157
    %v164 = vsel %vm76, %v163, %v161
    %v165 = vld [vmem:[%s6] sm:$0xff]
    %v166 = vld [vmem:[%s6 + $0x8] sm:$0xff]
    %v167 = vld [vmem:[%s6 + $0x10] sm:$0xff]
    %v168 = vld [vmem:[%s6 + $0x18] sm:$0xff]
    %v169 = vld [vmem:[%s6 + $0x20] sm:$0xff]
    %v170 = vld [vmem:[%s6 + $0x28] sm:$0xff]
    %v171 = vld [vmem:[%s6 + $0x30] sm:$0xff]
    %v172 = vld [vmem:[%s6 + $0x38] sm:$0xff]
    %v173 = vld [vmem:[%s6 + $0x40] sm:$0xff]
    %v174 = vld [vmem:[%s6 + $0x48] sm:$0xff]
    %v175 = vld [vmem:[%s6 + $0x50] sm:$0xff]
    %v176 = vld [vmem:[%s6 + $0x58] sm:$0xff]
    %v177 = vld [vmem:[%s7] sm:$0x1]
    %v179 = vperm.slane %v177, 0
    %v182 = vsel %vm94, %v164, 0
    %184 = vmatpush.msra.mxu0 0.0
    %185 = vmatpush.msra.mxu0 0.0
    %186 = vmatpush.msra.mxu0 0.0
    %187 = vmatpush.msra.mxu0 0.0
    %188 = vmatpush.msra.mxu0 %v176
    %189 = vmatpush.msra.mxu0 %v175
    %190 = vmatpush.msra.mxu0 %v174
    %191 = vmatpush.msra.mxu0 %v173
    %192 = vmatpush.msra.mxu0 %v172
    %193 = vmatpush.msra.mxu0 %v171
    %194 = vmatpush.msra.mxu0 %v170
    %195 = vmatpush.msra.mxu0 %v169
    %196 = vmatpush.msra.mxu0 %v168
    %197 = vmatpush.msra.mxu0 %v167
    %198 = vmatpush.msra.mxu0 %v166
    %199 = vmatpush.msra.mxu0 %v165
    %200 = vmatmul.f32.gmra.mxu0 %v182
    %v201 = vpop.f32.mrf.mxu0
    %v202 = vadd.f32 %v179, %v201
    %203 = vdwg.mxu0
    %v204 = vmax.f32 %v202, 0.0
    %v205 = vrot.slane %v118, 1
    %v206 = vsel %vm57, 1, 0
    %vm207 = vcmp.eq.s32.totalorder %v206, 1
    %v208 = vsel %vm207, 0.0, %v205
    %209 = vrot.lane.b32.xlu0 %v152, 32
    %v210 = vpop.permute.xlu0 %209
    %213 = vrot.lane.b32.xlu0 %v208, 64
    %v214 = vpop.permute.xlu0 %213
    %v216 = vsel %vm74, %v118, %v210
    %v217 = vsel %vm76, %v216, %v214
    %v219 = vsel %vm94, %v217, 0
    %221 = vmatpush.msra.mxu0 0.0
    %222 = vmatpush.msra.mxu0 0.0
    %223 = vmatpush.msra.mxu0 0.0
    %224 = vmatpush.msra.mxu0 0.0
    %225 = vmatpush.msra.mxu0 %v176
    %226 = vmatpush.msra.mxu0 %v175
    %227 = vmatpush.msra.mxu0 %v174
    %228 = vmatpush.msra.mxu0 %v173
    %229 = vmatpush.msra.mxu0 %v172
    %230 = vmatpush.msra.mxu0 %v171
    %231 = vmatpush.msra.mxu0 %v170
    %232 = vmatpush.msra.mxu0 %v169
    %233 = vmatpush.msra.mxu0 %v168
    %234 = vmatpush.msra.mxu0 %v167
    %235 = vmatpush.msra.mxu0 %v166
    %236 = vmatpush.msra.mxu0 %v165
    %237 = vmatmul.f32.gmra.mxu0 %v219
    %v238 = vpop.f32.mrf.mxu0
    %v239 = vadd.f32 %v179, %v238
    %240 = vdwg.mxu0
    %v241 = vmax.f32 %v239, 0.0
    %v242 = vmax.f32 %v62, %v59
    %v243 = vsel %vm64, %v59, %v242
    %v244 = vmax.f32 %v59, %v61
    %v245 = vadd.f32 %v204, %v243
    %v246 = vadd.f32 %v241, %v244
    %v247 = vrot.slane %v246, 7
    %v248 = vsel %vm64, 0.0, %v247
    %250 = vrot.lane.b32.xlu0 %v245, 32
    %v251 = vpop.permute.xlu0 %250
    %254 = vrot.lane.b32.xlu0 %v246, 64
    %v255 = vpop.permute.xlu0 %254
    %v257 = vsel %vm74, %v248, %v251
    %v258 = vsel %vm76, %v257, %v255
    %v259 = vld [vmem:[%s8] sm:$0xff]
    %v260 = vld [vmem:[%s8 + $0x8] sm:$0xff]
    %v261 = vld [vmem:[%s8 + $0x10] sm:$0xff]
    %v262 = vld [vmem:[%s8 + $0x18] sm:$0xff]
    %v263 = vld [vmem:[%s8 + $0x20] sm:$0xff]
    %v264 = vld [vmem:[%s8 + $0x28] sm:$0xff]
    %v265 = vld [vmem:[%s8 + $0x30] sm:$0xff]
    %v266 = vld [vmem:[%s8 + $0x38] sm:$0xff]
    %v267 = vld [vmem:[%s8 + $0x40] sm:$0xff]
    %v268 = vld [vmem:[%s8 + $0x48] sm:$0xff]
    %v269 = vld [vmem:[%s8 + $0x50] sm:$0xff]
    %v270 = vld [vmem:[%s8 + $0x58] sm:$0xff]
    %v271 = vld [vmem:[%s9] sm:$0x1]
    %v273 = vperm.slane %v271, 0
    %v276 = vsel %vm94, %v258, 0
    %278 = vmatpush.msra.mxu0 0.0
    %279 = vmatpush.msra.mxu0 0.0
    %280 = vmatpush.msra.mxu0 0.0
    %281 = vmatpush.msra.mxu0 0.0
    %282 = vmatpush.msra.mxu0 %v270
    %283 = vmatpush.msra.mxu0 %v269
    %284 = vmatpush.msra.mxu0 %v268
    %285 = vmatpush.msra.mxu0 %v267
    %286 = vmatpush.msra.mxu0 %v266
    %287 = vmatpush.msra.mxu0 %v265
    %288 = vmatpush.msra.mxu0 %v264
    %289 = vmatpush.msra.mxu0 %v263
    %290 = vmatpush.msra.mxu0 %v262
    %291 = vmatpush.msra.mxu0 %v261
    %292 = vmatpush.msra.mxu0 %v260
    %293 = vmatpush.msra.mxu0 %v259
    %294 = vmatmul.f32.gmra.mxu0 %v276
    %v295 = vpop.f32.mrf.mxu0
    %v296 = vadd.f32 %v273, %v295
    %297 = vdwg.mxu0
    %v298 = vmax.f32 %v296, 0.0
    %v299 = vrot.slane %v298, 7
    %v300 = vsel %vm64, 0.0, %v299
    %v301 = vrot.slane %v298, 1
    %v302 = vsel %vm207, 0.0, %v301
    %304 = vrot.lane.b32.xlu0 %v298, 64
    %v305 = vpop.permute.xlu0 %304
    %v307 = vsel %vm76, %v300, %v305
    %v308 = vld [vmem:[%s10] sm:$0xff]
    %v309 = vld [vmem:[%s10 + $0x8] sm:$0xff]
    %v310 = vld [vmem:[%s10 + $0x10] sm:$0xff]
    %v311 = vld [vmem:[%s10 + $0x18] sm:$0xff]
    %v312 = vld [vmem:[%s10 + $0x20] sm:$0xff]
    %v313 = vld [vmem:[%s10 + $0x28] sm:$0xff]
    %v314 = vld [vmem:[%s10 + $0x30] sm:$0xff]
    %v315 = vld [vmem:[%s10 + $0x38] sm:$0xff]
    %v316 = vld [vmem:[%s10 + $0x40] sm:$0xff]
    %v317 = vld [vmem:[%s10 + $0x48] sm:$0xff]
    %v318 = vld [vmem:[%s10 + $0x50] sm:$0xff]
    %v319 = vld [vmem:[%s10 + $0x58] sm:$0xff]
    %v320 = vld [vmem:[%s10 + $0x60] sm:$0xff]
    %v321 = vld [vmem:[%s10 + $0x68] sm:$0xff]
    %v322 = vld [vmem:[%s10 + $0x70] sm:$0xff]
    %v323 = vld [vmem:[%s10 + $0x78] sm:$0xff]
    %v324 = vld [vmem:[%s10 + $0x80] sm:$0xff]
    %v325 = vld [vmem:[%s10 + $0x88] sm:$0xff]
    %v326 = vld [vmem:[%s10 + $0x90] sm:$0xff]
    %v327 = vld [vmem:[%s10 + $0x98] sm:$0xff]
    %v328 = vld [vmem:[%s10 + $0xa0] sm:$0xff]
    %v329 = vld [vmem:[%s10 + $0xa8] sm:$0xff]
    %v330 = vld [vmem:[%s10 + $0xb0] sm:$0xff]
    %v331 = vld [vmem:[%s10 + $0xb8] sm:$0xff]
    %v332 = vld [vmem:[%s11] sm:$0x1]
    %v334 = vperm.slane %v332, 0
    %v337 = vsel %vm76, %v302, 0
    %339 = vmatpush.msra.mxu0 %v323
    %340 = vmatpush.msra.mxu0 %v322
    %341 = vmatpush.msra.mxu0 %v321
    %342 = vmatpush.msra.mxu0 %v320
    %343 = vmatpush.msra.mxu0 %v319
    %344 = vmatpush.msra.mxu0 %v318
    %345 = vmatpush.msra.mxu0 %v317
    %346 = vmatpush.msra.mxu0 %v316
    %347 = vmatpush.msra.mxu0 %v315
    %348 = vmatpush.msra.mxu0 %v314
    %349 = vmatpush.msra.mxu0 %v313
    %350 = vmatpush.msra.mxu0 %v312
    %351 = vmatpush.msra.mxu0 %v311
    %352 = vmatpush.msra.mxu0 %v310
    %353 = vmatpush.msra.mxu0 %v309
    %354 = vmatpush.msra.mxu0 %v308
    %355 = vmatmul.f32.gmra.mxu0 %v307
    %v356 = vpop.f32.mrf.mxu0
    %v357 = vadd.f32 %v334, %v356
    %358 = vdwg.mxu0
    %359 = vmatpush.msra.mxu0 0.0
    %360 = vmatpush.msra.mxu0 0.0
    %361 = vmatpush.msra.mxu0 0.0
    %362 = vmatpush.msra.mxu0 0.0
    %363 = vmatpush.msra.mxu0 0.0
    %364 = vmatpush.msra.mxu0 0.0
    %365 = vmatpush.msra.mxu0 0.0
    %366 = vmatpush.msra.mxu0 0.0
    %367 = vmatpush.msra.mxu0 %v331
    %368 = vmatpush.msra.mxu0 %v330
    %369 = vmatpush.msra.mxu0 %v329
    %370 = vmatpush.msra.mxu0 %v328
    %371 = vmatpush.msra.mxu0 %v327
    %372 = vmatpush.msra.mxu0 %v326
    %373 = vmatpush.msra.mxu0 %v325
    %374 = vmatpush.msra.mxu0 %v324
    %375 = vmatmul.f32.gmra.mxu0 %v337
    %v376 = vpop.f32.mrf.mxu0
    %v377 = vadd.f32 %v357, %v376
    %378 = vdwg.mxu0
    %v379 = vmax.f32 %v377, 0.0
    %v380 = vmax.f32 %v247, %v246
    %v381 = vsel %vm64, %v246, %v380
    %v382 = vsel %vm74, %v381, 0.0
    %v383 = vadd.f32 %v379, %v382
    %384 = vst.msk [vmem:[#allocation2] sm:$0xff] %vm76, %v383
    // Predicated region
    $region50: #{backbone_block_forward.1} parent=1 // pred_check
      _
    $region51: #{backbone_block_forward.1} parent=1 // pred_check_branch
      %386 = sbr.rel (0) target = $region53
    $region52: #{backbone_block_forward.1} parent=1 // pred_region
      %388 = vsyncadd [#allocation3], 0
      %s390 = sshll.u32 [#allocation2], 4
      %s391 = int_to_ptr.vmem [resolvable:$true] %s390
      %s392 = sshll.u32 %s12, 4
      %s393 = int_to_ptr.hbm [resolvable:$true] %s392
      %395 = dma.vmem_to_hbm [thread:$0]  %s391, 128, %s393, [#allocation3]
    $region53: #{backbone_block_forward.1} parent=1 // pred_fallthru
      _
    // Predicated region
    $region54: #{backbone_block_forward.1} parent=1 // pred_check
      _
    $region55: #{backbone_block_forward.1} parent=1 // pred_check_branch
      %397 = sbr.rel (0) target = $region57
    $region56: #{backbone_block_forward.1} parent=1 // pred_region
      %399 = dma.done [#allocation3], 128
    $region57: #{backbone_block_forward.1} parent=1 // pred_fallthru
      _
    %400 = vsyncpa [#allocation3], 1

</llo_original>
